<compile_context>
chip_gen: v5e
topology: v5e:2x2
jax: 0.10.0
libtpu: 0.0.40
codegen_flags: <defaults>
</compile_context>

<pallas_src>
import jax
import jax.numpy as jnp
from jax.experimental import pallas as pl
from jax.experimental.pallas import tpu as pltpu


def _round_up(x, m):
    return (x + m - 1) // m * m


def _vmem_limit(nbytes, floor=32 << 20, ceil=64 << 20, headroom=4 << 20):
    """Scoped-VMEM request computed from the block footprint, clamped so it is
    valid on v5e/v6e (128 MiB) and v7x (64 MiB)."""
    return int(min(max(nbytes + headroom, floor), ceil))


# ---------------------------------------------------------------------------
# Kernel 1: fused  item_sim = A^T @ A ; item_sim /= T ; row-softmax (+1e-10)
# Grid iterates over row tiles of the similarity matrix; each step contracts a
# (tile_rows, U) slice of A^T against the resident full A, so the whole
# softmax row is local to the step.  Padded item columns are masked to -inf.
# ---------------------------------------------------------------------------
def _sim_softmax_kernel(temp_ref, nvalid_ref, at_ref, a_ref, out_ref):
    # (TR, U) @ (U, I) -> (TR, I) block of A^T A on the MXU (bf16 in, f32 acc).
    sim = jnp.dot(at_ref[...], a_ref[...], preferred_element_type=jnp.float32)
    inv_t = 1.0 / temp_ref[0]                       # scalar from SMEM, free
    sim = sim * inv_t
    # Mask padded item columns so they contribute zero probability.
    col = jax.lax.broadcasted_iota(jnp.int32, sim.shape, 1)
    sim = jnp.where(col < nvalid_ref[0], sim, -jnp.inf)
    row_max = jnp.max(sim, axis=-1, keepdims=True)
    e = jnp.exp(sim - row_max)
    row_sum = jnp.sum(e, axis=-1, keepdims=True)
    out_ref[...] = e * pl.reciprocal(row_sum + 1e-10, approx=False)


def setup_norm_item_sim(adj, temperature):
    """Dense equivalent of SimpleRawModel._setup_normalization (returns f32)."""
    n_users, n_items = adj.shape
    n_users_pad = _round_up(n_users, 8)
    n_items_pad = _round_up(n_items, 128)
    # Row-tile: prefer 256 (v6e/v7x MXU width) but keep >=2 grid steps so both
    # v7x TensorCores get work; n_items_pad is a multiple of 128 so 128 divides.
    if n_items_pad % 256 == 0 and n_items_pad // 256 >= 2:
        tile_rows = 256
    else:
        tile_rows = 128

    adj_p = jnp.pad(
        adj, ((0, n_users_pad - n_users), (0, n_items_pad - n_items))
    ).astype(jnp.bfloat16)                # binary matrix -> bf16 is bit-exact
    adj_t = adj_p.T                       # one-time transpose: (I, U)

    temp_arr = jnp.asarray([temperature], dtype=jnp.float32)
    nvalid = jnp.asarray([n_items], dtype=jnp.int32)

    vmem = _vmem_limit(
        2 * n_users_pad * n_items_pad * 2          # full A (bf16)
        + 2 * tile_rows * n_users_pad * 2          # A^T row tile (bf16)
        + 2 * tile_rows * n_items_pad * 4          # output slab (f32)
        + 2 * tile_rows * n_items_pad * 4          # f32 temporaries (sim/exp)
    )

    out = pl.pallas_call(
        _sim_softmax_kernel,
        out_shape=jax.ShapeDtypeStruct((n_items_pad, n_items_pad), jnp.float32),
        grid=(n_items_pad // tile_rows,),
        in_specs=[
            pl.BlockSpec(memory_space=pltpu.MemorySpace.SMEM),   # temperature
            pl.BlockSpec(memory_space=pltpu.MemorySpace.SMEM),   # n_items valid
            pl.BlockSpec((tile_rows, n_users_pad), lambda i: (i, 0)),   # A^T tile
            pl.BlockSpec((n_users_pad, n_items_pad), lambda i: (0, 0)),  # full A (resident)
        ],
        out_specs=pl.BlockSpec((tile_rows, n_items_pad), lambda i: (i, 0)),
        compiler_params=pltpu.CompilerParams(
            dimension_semantics=("parallel",),
            vmem_limit_bytes=vmem),
    )(temp_arr, nvalid, adj_t, adj_p)
    return out[:n_items, :n_items]


# ---------------------------------------------------------------------------
# Kernel 2: scores = adj[users] @ norm_item_sim
# The (small) batch matrix stays fully VMEM-resident (index_map constant), the
# full contraction dim is done per output-column tile: no accumulator, no
# redundant batch DMA, norm_item_sim streamed exactly once.
# ---------------------------------------------------------------------------
def _score_kernel(b_ref, s_ref, o_ref):
    o_ref[...] = jnp.dot(b_ref[...], s_ref[...],
                         preferred_element_type=jnp.float32)


def forward(adj, norm_item_sim, users):
    """Dense equivalent of SimpleRawModel.forward (returns float32 scores)."""
    batch_test = adj[users]               # glue: row gather in plain JAX
    b, n_items = batch_test.shape
    b_pad = _round_up(b, 8)
    n_items_pad = _round_up(n_items, 128)
    if n_items_pad % 256 == 0 and n_items_pad // 256 >= 2:
        tn = 256
    else:
        tn = 128

    batch_p = jnp.pad(
        batch_test, ((0, b_pad - b), (0, n_items_pad - n_items))
    ).astype(jnp.float32)
    # norm_item_sim must stay f32 (softmax probabilities); pad with zeros.
    sim_p = jnp.pad(
        norm_item_sim,
        ((0, n_items_pad - n_items), (0, n_items_pad - n_items)),
    ).astype(jnp.float32)

    vmem = _vmem_limit(
        2 * b_pad * n_items_pad * 4                # resident batch rows
        + 2 * n_items_pad * tn * 4                 # norm_item_sim column slab
        + 2 * b_pad * tn * 4                       # output tile
    )

    scores = pl.pallas_call(
        _score_kernel,
        out_shape=jax.ShapeDtypeStruct((b_pad, n_items_pad), jnp.float32),
        grid=(n_items_pad // tn,),
        in_specs=[
            pl.BlockSpec((b_pad, n_items_pad), lambda j: (0, 0)),   # resident B
            pl.BlockSpec((n_items_pad, tn), lambda j: (0, j)),      # S column slab
        ],
        out_specs=pl.BlockSpec((b_pad, tn), lambda j: (0, j)),
        compiler_params=pltpu.CompilerParams(
            dimension_semantics=("parallel",),
            vmem_limit_bytes=vmem),
    )(batch_p, sim_p)
    # TODO(synk): at very large n_items / batch, re-introduce a K grid axis (or
    # fuse scoring into kernel 1) instead of the full-K column slab.
    return scores[:b, :n_items]


if __name__ == "__main__":
    key = jax.random.PRNGKey(0)
    n_users, n_items, batch = 64, 256, 8

    k_adj, k_users = jax.random.split(key)
    # Binary user-item interaction matrix (dense stand-in for the sparse adj).
    adj = jax.random.bernoulli(k_adj, p=0.1,
                               shape=(n_users, n_items)).astype(jnp.float32)
    temperature = 1.0                      # nn.Parameter initial value
    users = jax.random.randint(k_users, (batch,), 0, n_users)

    norm_item_sim = setup_norm_item_sim(adj, temperature)
    scores = forward(adj, norm_item_sim, users)
    jax.block_until_ready(scores)

    # Reference check (pure JAX) of the full pipeline.
    sim_ref = (adj.T @ adj) / temperature
    e = jnp.exp(sim_ref - jnp.max(sim_ref, axis=1, keepdims=True))
    norm_ref = e / (jnp.sum(e, axis=1, keepdims=True) + 1e-10)
    scores_ref = adj[users] @ norm_ref

    assert norm_item_sim.shape == (n_items, n_items)
    assert scores.dtype == jnp.float32
    assert jnp.allclose(norm_item_sim, norm_ref, atol=1e-5, rtol=1e-5)
    assert jnp.allclose(scores, scores_ref, atol=1e-5, rtol=1e-5)

    print("KERNEL_OK")
</pallas_src>

<mosaic_0001>
module attributes {stable_mosaic.version = 11 : i64} {
  func.func @_sim_softmax_kernel(%arg0: i32, %arg1: memref<1xf32, #tpu.memory_space<smem>>, %arg2: memref<1xi32, #tpu.memory_space<smem>>, %arg3: memref<128x64xbf16, #tpu.memory_space<vmem>>, %arg4: memref<64x256xbf16, #tpu.memory_space<vmem>>, %arg5: memref<128x256xf32, #tpu.memory_space<vmem>>) attributes {dimension_semantics = [#tpu.dimension_semantics<parallel>], iteration_bounds = array<i64: 2>, scalar_prefetch = 0 : i64, scratch_operands = 0 : i64, tpu.core_type = #tpu.core_type<tc>, window_params = [{transform_indices = @transform_0, window_bounds = array<i64: 1>}, {transform_indices = @transform_1, window_bounds = array<i64: 1>}, {transform_indices = @transform_2, window_bounds = array<i64: 128, 64>}, {pipeline_mode = #tpu.pipeline_mode<synchronous>, transform_indices = @transform_3, window_bounds = array<i64: 64, 256>}, {transform_indices = @transform_4, window_bounds = array<i64: 128, 256>}]} {
    %c0 = arith.constant 0 : index
    %c0_0 = arith.constant 0 : index
    %0 = vector.load %arg3[%c0, %c0_0] : memref<128x64xbf16, #tpu.memory_space<vmem>>, vector<128x64xbf16>
    %c0_1 = arith.constant 0 : index
    %c0_2 = arith.constant 0 : index
    %1 = vector.load %arg4[%c0_1, %c0_2] : memref<64x256xbf16, #tpu.memory_space<vmem>>, vector<64x256xbf16>
    %cst = arith.constant dense<0.000000e+00> : vector<128x256xf32>
    %2 = tpu.matmul %0, %1, %cst {dimension_numbers = #tpu.dot_dimension_numbers<[1], [0], [0], [1], [0, 0, 1, 1], [], []>} : vector<128x64xbf16>, vector<64x256xbf16>, vector<128x256xf32> -> vector<128x256xf32>
    %c0_3 = arith.constant 0 : index
    %3 = memref.load %arg1[%c0_3] : memref<1xf32, #tpu.memory_space<smem>>
    %cst_4 = arith.constant 1.000000e+00 : f32
    %4 = arith.divf %cst_4, %3 : f32
    %5 = vector.broadcast %4 : f32 to vector<128x256xf32>
    %6 = arith.mulf %2, %5 : vector<128x256xf32>
    %7 = tpu.iota {dimensions = array<i32: 1>} : vector<128x256xi32>
    %c0_5 = arith.constant 0 : index
    %8 = memref.load %arg2[%c0_5] : memref<1xi32, #tpu.memory_space<smem>>
    %9 = vector.broadcast %8 : i32 to vector<128x256xi32>
    %10 = arith.cmpi slt, %7, %9 : vector<128x256xi32>
    %cst_6 = arith.constant 0xFF800000 : f32
    %11 = vector.broadcast %cst_6 : f32 to vector<128x256xf32>
    %12 = arith.select %10, %6, %11 : vector<128x256xi1>, vector<128x256xf32>
    %cst_7 = arith.constant dense<0xFF800000> : vector<128xf32>
    %13 = vector.multi_reduction <maximumf>, %12, %cst_7 [1] : vector<128x256xf32> to vector<128xf32>
    %14 = vector.shape_cast %13 : vector<128xf32> to vector<128x1xf32>
    %15 = vector.broadcast %14 : vector<128x1xf32> to vector<128x256xf32>
    %16 = arith.subf %12, %15 : vector<128x256xf32>
    %17 = math.exp %16 : vector<128x256xf32>
    %cst_8 = arith.constant dense<0.000000e+00> : vector<128xf32>
    %18 = vector.multi_reduction <add>, %17, %cst_8 [1] : vector<128x256xf32> to vector<128xf32>
    %19 = vector.shape_cast %18 : vector<128xf32> to vector<128x1xf32>
    %cst_9 = arith.constant 1.000000e-10 : f32
    %20 = vector.broadcast %cst_9 : f32 to vector<128x1xf32>
    %21 = arith.addf %19, %20 : vector<128x1xf32>
    %22 = tpu.reciprocal %21 : vector<128x1xf32> -> vector<128x1xf32>
    %23 = vector.broadcast %22 : vector<128x1xf32> to vector<128x256xf32>
    %24 = arith.mulf %17, %23 : vector<128x256xf32>
    %c0_10 = arith.constant 0 : index
    %c0_11 = arith.constant 0 : index
    %25 = vector.load %arg5[%c0_10, %c0_11] : memref<128x256xf32, #tpu.memory_space<vmem>>, vector<128x256xf32>
    tpu.vector_store %arg5[%c0_10, %c0_11], %24 {strides = array<i32>} : memref<128x256xf32, #tpu.memory_space<vmem>>, vector<128x256xf32>,
    return
  }
  func.func @transform_0(%arg0: i32) -> i32 {
    %c0_i32 = arith.constant 0 : i32
    %c0_i32_0 = arith.constant 0 : i32
    return %c0_i32 : i32
  }
  func.func @transform_1(%arg0: i32) -> i32 {
    %c0_i32 = arith.constant 0 : i32
    %c0_i32_0 = arith.constant 0 : i32
    return %c0_i32 : i32
  }
  func.func @transform_2(%arg0: i32) -> (i32, i32) {
    %c0_i32 = arith.constant 0 : i32
    %c0_i32_0 = arith.constant 0 : i32
    return %arg0, %c0_i32 : i32, i32
  }
  func.func @transform_3(%arg0: i32) -> (i32, i32) {
    %c0_i32 = arith.constant 0 : i32
    %c0_i32_0 = arith.constant 0 : i32
    %c0_i32_1 = arith.constant 0 : i32
    return %c0_i32, %c0_i32_0 : i32, i32
  }
  func.func @transform_4(%arg0: i32) -> (i32, i32) {
    %c0_i32 = arith.constant 0 : i32
    %c0_i32_0 = arith.constant 0 : i32
    return %arg0, %c0_i32 : i32, i32
  }
}

</mosaic_0001>

<llo_original>
// kernel: tpu_custom_call.1
$region0: #{tpu_custom_call.1}
  #allocation0 [shape = 'u32[]', space=smem, size = 0x4, offset = 0x4, fixed_abs, tag = 'smem constant byte address 0x4 - core index']
  #allocation1 [shape = 'u32[72,128]{1,0:T(1,128)}', space=vmem, size = 0x9000, scoped, tag = 'internal scratch']
  #allocation2 [shape = 'f32[1]{0:T(128)S(6)}', space=smem, size = 0x200, scoped, tag = 'scoped memory for tpu_custom_call.1']
  #allocation3 [shape = 's32[1]{0:T(128)S(6)}', space=smem, size = 0x200, scoped, tag = 'scoped memory for tpu_custom_call.1']
  %s0 = inlined_call_operand.<no memory space> [shape: f32[1], index: 0, kind: input, shape index: {}]
  %s1 = inlined_call_operand.<no memory space> [shape: s32[1], index: 1, kind: input, shape index: {}]
  %s2 = inlined_call_operand.vmem [shape: bf16[256,64], index: 2, kind: input, shape index: {}]
  %s3 = inlined_call_operand.vmem [shape: bf16[64,256], index: 3, kind: input, shape index: {}]
  %s4 = inlined_call_operand.hbm [shape: f32[256,256], index: 4, kind: output, shape index: {}]
  %s5 = sld [smem:[#allocation0]]
  $region49: #{tpu_custom_call.1} parent=0
    _
  %s7 = ssub.s32 1, %s5
  %s8 = scalar_select 0, %s7, %s5
  %9 = sst [smem:[#allocation2]] %s0
  %10 = sst [smem:[#allocation3]] %s1
  $region1: #{tpu_custom_call.1} parent=0
    #allocation4 [shape = 'u8[262144]{0}', space=vmem, size = 0x40000, scoped, tag = 'output window, operand 0']
    #allocation5 [shape = 's32[2]{0}', space=sflag, size = 0x8, scoped, tag = 'scoped memory for tpu_custom_call.1']
    %11 = vsyncpa [#allocation5], 0
    %s12 = scalar_lea.sflag [#allocation5], 1
    %13 = vsyncpa %s12, 0
    loop: start=0, step=1, limit=4
    $region2: #{tpu_custom_call.1} parent=1 // loop_pre_header
      _
    $region3: #{tpu_custom_call.1} parent=1 // loop_header
      %s15 = sphi 0, %s19
      %p16 = scmp.ge.s32.totalorder %s15, 4
      %s23 = sphi 0, %s23
      %s25 = sphi 0, %s23
      %s26 = sphi 0, %s25
      %s40 = sphi 0, %s26
      %s44 = sphi 0, %s44
      %s46 = sphi 0, %s44
      %s47 = sphi 0, %s46
      %s61 = sphi 0, %s47
      %s67 = sphi 0, %s69
      %s70 = sphi 0, %s67
      %s71 = sphi 0, %s70
      %s87 = sphi 0, %s71
      %s91 = sphi 0, %s91
      %s93 = sphi 0, %s91
      %s94 = sphi 0, %s93
      %s108 = sphi 0, %s94
      %s114 = sphi 0, %s116
      %s117 = sphi 0, %s114
      %s118 = sphi 0, %s117
      %s134 = sphi 0, %s118
    $region4: #{tpu_custom_call.1} parent=1 // loop_header_branch
      %18 = sbr.rel (%p16) target = $region8
    $region5: #{tpu_custom_call.1} parent=1 // loop_body
      %s20 = ssub.s32 %s15, 1
      %s21 = ssub.s32 %s15, 2
      %s22 = sadd.s32 %s15, 1
      %s24 = sadd.s32 %s23, 1
      %p27 = scmp.eq.s32.totalorder %s15, 1
      %p28 = scmp.ne.s32.totalorder %s23, %s25
      %p29 = scmp.eq.s32.totalorder %s15, 0
      %p30 = por %p28, %p29
      %p31 = scmp.ne.s32.totalorder %s23, %s25
      %p32 = scmp.eq.s32.totalorder %s20, 1
      %p33 = por %p31, %p32
      %p34 = scmp.ne.s32.totalorder %s25, %s26
      %p35 = scmp.eq.s32.totalorder %s20, 0
      %p36 = por %p34, %p35
      %p37 = scmp.ne.s32.totalorder %s25, %s26
      %p38 = scmp.eq.s32.totalorder %s21, 1
      %p39 = por %p37, %p38
      %p41 = scmp.ne.s32.totalorder %s26, %s40
      %p42 = scmp.eq.s32.totalorder %s21, 0
      %p43 = por %p41, %p42
      %s45 = sadd.s32 %s44, 1
      %p48 = scmp.eq.s32.totalorder %s15, 1
      %p49 = scmp.ne.s32.totalorder %s44, %s46
      %p50 = scmp.eq.s32.totalorder %s15, 0
      %p51 = por %p49, %p50
      %p52 = scmp.ne.s32.totalorder %s44, %s46
      %p53 = scmp.eq.s32.totalorder %s20, 1
      %p54 = por %p52, %p53
      %p55 = scmp.ne.s32.totalorder %s46, %s47
      %p56 = scmp.eq.s32.totalorder %s20, 0
      %p57 = por %p55, %p56
      %p58 = scmp.ne.s32.totalorder %s46, %s47
      %p59 = scmp.eq.s32.totalorder %s21, 1
      %p60 = por %p58, %p59
      %p62 = scmp.ne.s32.totalorder %s47, %s61
      %p63 = scmp.eq.s32.totalorder %s21, 0
      %p64 = por %p62, %p63
      %s65 = ssub.s32 %s15, %s22
      %p66 = scmp.eq.s32.totalorder %s65, 0
      %s68 = sadd.s32 %s67, 1
      %s69 = scalar_select %p66, %s67, %s68
      %p72 = pneg %p66
      %p73 = scmp.eq.s32.totalorder %s15, 1
      %p74 = por %p72, %p73
      %p75 = scmp.ne.s32.totalorder %s67, %s70
      %p76 = scmp.eq.s32.totalorder %s15, 0
      %p77 = por %p75, %p76
      %p78 = scmp.ne.s32.totalorder %s67, %s70
      %p79 = scmp.eq.s32.totalorder %s20, 1
      %p80 = por %p78, %p79
      %p81 = scmp.ne.s32.totalorder %s70, %s71
      %p82 = scmp.eq.s32.totalorder %s20, 0
      %p83 = por %p81, %p82
      %p84 = scmp.ne.s32.totalorder %s70, %s71
      %p85 = scmp.eq.s32.totalorder %s21, 1
      %p86 = por %p84, %p85
      %p88 = scmp.ne.s32.totalorder %s71, %s87
      %p89 = scmp.eq.s32.totalorder %s21, 0
      %p90 = por %p88, %p89
      %s92 = sadd.s32 %s91, 1
      %p95 = scmp.eq.s32.totalorder %s15, 1
      %p96 = scmp.ne.s32.totalorder %s91, %s93
      %p97 = scmp.eq.s32.totalorder %s15, 0
      %p98 = por %p96, %p97
      %p99 = scmp.ne.s32.totalorder %s91, %s93
      %p100 = scmp.eq.s32.totalorder %s20, 1
      %p101 = por %p99, %p100
      %p102 = scmp.ne.s32.totalorder %s93, %s94
      %p103 = scmp.eq.s32.totalorder %s20, 0
      %p104 = por %p102, %p103
      %p105 = scmp.ne.s32.totalorder %s93, %s94
      %p106 = scmp.eq.s32.totalorder %s21, 1
      %p107 = por %p105, %p106
      %p109 = scmp.ne.s32.totalorder %s94, %s108
      %p110 = scmp.eq.s32.totalorder %s21, 0
      %p111 = por %p109, %p110
      %s112 = ssub.s32 %s15, %s22
      %p113 = scmp.eq.s32.totalorder %s112, 0
      %s115 = sadd.s32 %s114, 1
      %s116 = scalar_select %p113, %s114, %s115
      %p119 = pneg %p113
      %p120 = scmp.eq.s32.totalorder %s15, 1
      %p121 = por %p119, %p120
      %p122 = scmp.ne.s32.totalorder %s114, %s117
      %p123 = scmp.eq.s32.totalorder %s15, 0
      %p124 = por %p122, %p123
      %p125 = scmp.ne.s32.totalorder %s114, %s117
      %p126 = scmp.eq.s32.totalorder %s20, 1
      %p127 = por %p125, %p126
      %p128 = scmp.ne.s32.totalorder %s117, %s118
      %p129 = scmp.eq.s32.totalorder %s20, 0
      %p130 = por %p128, %p129
      %p131 = scmp.ne.s32.totalorder %s117, %s118
      %p132 = scmp.eq.s32.totalorder %s21, 1
      %p133 = por %p131, %p132
      %p135 = scmp.ne.s32.totalorder %s118, %s134
      %p136 = scmp.eq.s32.totalorder %s21, 0
      %p137 = por %p135, %p136
      %p138 = scmp.le.s32.totalorder 1, %s15
      %p139 = scmp.lt.s32.totalorder %s15, 3
      %p140 = pnand %p138, %p139
      %p141 = pneg %p140
      // Predicated region
      $region9: #{tpu_custom_call.1} parent=5 // pred_check
        _
      $region10: #{tpu_custom_call.1} parent=5 // pred_check_branch
        %143 = sbr.rel (%p140) target = $region12
      $region11: #{tpu_custom_call.1} parent=5 // pred_region
        %s144 = ssub.s32 %s15, 1
        // Predicated region
        $region13: #{tpu_custom_call.1} parent=11 // pred_check
          %p145 = pneg %p36
        $region14: #{tpu_custom_call.1} parent=11 // pred_check_branch
          %147 = sbr.rel (%p145) target = $region16
        $region15: #{tpu_custom_call.1} parent=11 // pred_region
          _
        $region16: #{tpu_custom_call.1} parent=11 // pred_fallthru
          _
        // Predicated region
        $region17: #{tpu_custom_call.1} parent=11 // pred_check
          %p148 = pneg %p57
        $region18: #{tpu_custom_call.1} parent=11 // pred_check_branch
          %150 = sbr.rel (%p148) target = $region20
        $region19: #{tpu_custom_call.1} parent=11 // pred_region
          _
        $region20: #{tpu_custom_call.1} parent=11 // pred_fallthru
          _
        // Predicated region
        $region21: #{tpu_custom_call.1} parent=11 // pred_check
          %p151 = pneg %p104
        $region22: #{tpu_custom_call.1} parent=11 // pred_check_branch
          %153 = sbr.rel (%p151) target = $region24
        $region23: #{tpu_custom_call.1} parent=11 // pred_region
          _
        $region24: #{tpu_custom_call.1} parent=11 // pred_fallthru
          _
      $region12: #{tpu_custom_call.1} parent=5 // pred_fallthru
        _
      %p154 = scmp.lt.s32.totalorder %s15, 2
      // Predicated region
      $region25: #{tpu_custom_call.1} parent=5 // pred_check
        %p155 = pneg %p154
      $region26: #{tpu_custom_call.1} parent=5 // pred_check_branch
        %157 = sbr.rel (%p155) target = $region28
      $region27: #{tpu_custom_call.1} parent=5 // pred_region
        // Predicated region
        $region29: #{tpu_custom_call.1} parent=27 // pred_check
          %p158 = pneg %p77
        $region30: #{tpu_custom_call.1} parent=27 // pred_check_branch
          %160 = sbr.rel (%p158) target = $region32
        $region31: #{tpu_custom_call.1} parent=27 // pred_region
          %s161 = smul.u32 16, %s15
          %p162 = scmp.lt.s32.totalorder %s161, 31
          %s163 = scalar_select %p162, %s161, 31
          %s164 = smul.addr %s163, 4
          %s165 = scalar_lea.vmem %s2, %s164
          %s166 = smul.u32 16, %s15
        $region32: #{tpu_custom_call.1} parent=27 // pred_fallthru
          _
      $region28: #{tpu_custom_call.1} parent=5 // pred_fallthru
        _
      %p167 = scmp.le.s32.totalorder 1, %s15
      %p168 = scmp.lt.s32.totalorder %s15, 3
      %p169 = pnand %p167, %p168
      %p170 = pneg %p169
      // Predicated region
      $region33: #{tpu_custom_call.1} parent=5 // pred_check
        _
      $region34: #{tpu_custom_call.1} parent=5 // pred_check_branch
        %172 = sbr.rel (%p169) target = $region36
      $region35: #{tpu_custom_call.1} parent=5 // pred_region
        %s173 = ssub.s32 %s15, 1
        %p174 = pneg %p36
        %p175 = pneg %p33
        %p176 = pneg %p57
        %p177 = pneg %p54
        %s178 = smul.u32 16, %s20
        %p179 = scmp.lt.s32.totalorder %s178, 31
        %s180 = scalar_select %p179, %s178, 31
        %s181 = smul.addr %s180, 4
        %s182 = scalar_lea.vmem %s2, %s181
        %p183 = pneg %p83
        %p184 = pneg %p80
        %p185 = pneg %p104
        %p186 = pneg %p101
        %p187 = pneg %p130
        %p188 = pneg %p127
        %s189 = sand.u32 %s117, 1
        %s190 = scalar_lea.sflag [#allocation5], %s189
        %s191 = sand.u32 %s117, 1
        %s192 = smul.addr %s191, 256
        %s193 = scalar_lea.vmem [#allocation4], %s192
        %s194 = smul.u32 16, %s20
        %p195 = scmp.lt.s32.totalorder %s194, 31
        %s196 = scalar_select %p195, %s194, 31
        %s197 = smul.addr %s196, 4
        %s198 = scalar_lea.vmem %s2, %s197
        %s199 = smul.u32 16, %s20
        %s200 = smul.u32 16, %s20
        %v202 = vld [vmem:[%s198] sm:$0xf]
        %v203 = vld [vmem:[%s198 + $0x4] sm:$0xf]
        %v204 = vld [vmem:[%s198 + $0x8] sm:$0xf]
        %v205 = vld [vmem:[%s198 + $0xc] sm:$0xf]
        %v206 = vld [vmem:[%s198 + $0x10] sm:$0xf]
        %v207 = vld [vmem:[%s198 + $0x14] sm:$0xf]
        %v208 = vld [vmem:[%s198 + $0x18] sm:$0xf]
        %v209 = vld [vmem:[%s198 + $0x1c] sm:$0xf]
        %v210 = vld [vmem:[%s198 + $0x20] sm:$0xf]
        %v211 = vld [vmem:[%s198 + $0x24] sm:$0xf]
        %v212 = vld [vmem:[%s198 + $0x28] sm:$0xf]
        %v213 = vld [vmem:[%s198 + $0x2c] sm:$0xf]
        %v214 = vld [vmem:[%s198 + $0x30] sm:$0xf]
        %v215 = vld [vmem:[%s198 + $0x34] sm:$0xf]
        %v216 = vld [vmem:[%s198 + $0x38] sm:$0xf]
        %v217 = vld [vmem:[%s198 + $0x3c] sm:$0xf]
        %v218 = vld [vmem:[%s3] sm:$0xff]
        %v219 = vld [vmem:[%s3 + $0x8] sm:$0xff]
        %v220 = vld [vmem:[%s3 + $0x10] sm:$0xff]
        %v221 = vld [vmem:[%s3 + $0x18] sm:$0xff]
        %v222 = vld [vmem:[%s3 + $0x20] sm:$0xff]
        %v223 = vld [vmem:[%s3 + $0x28] sm:$0xff]
        %v224 = vld [vmem:[%s3 + $0x30] sm:$0xff]
        %v225 = vld [vmem:[%s3 + $0x38] sm:$0xff]
        %v242 = vunpack.c.l.b16 %v202
        %v243 = vunpack.c.l.b16 %v203
        %v244 = vunpack.c.l.b16 %v204
        %v245 = vunpack.c.l.b16 %v205
        %v246 = vunpack.c.l.b16 %v206
        %v247 = vunpack.c.l.b16 %v207
        %v248 = vunpack.c.l.b16 %v208
        %v249 = vunpack.c.l.b16 %v209
        %v250 = vunpack.c.l.b16 %v210
        %v251 = vunpack.c.l.b16 %v211
        %v252 = vunpack.c.l.b16 %v212
        %v253 = vunpack.c.l.b16 %v213
        %v254 = vunpack.c.l.b16 %v214
        %v255 = vunpack.c.l.b16 %v215
        %v256 = vunpack.c.l.b16 %v216
        %v257 = vunpack.c.l.b16 %v217
        %v258 = vpack.c.b16 %v243, %v242
        %v259 = vpack.c.b16 %v245, %v244
        %v260 = vpack.c.b16 %v247, %v246
        %v261 = vpack.c.b16 %v249, %v248
        %v262 = vpack.c.b16 %v251, %v250
        %v263 = vpack.c.b16 %v253, %v252
        %v264 = vpack.c.b16 %v255, %v254
        %v265 = vpack.c.b16 %v257, %v256
        %v274 = vunpack.c.l.b16 %v218
        %v275 = vunpack.c.h.b16 %v218
        %v276 = vunpack.c.l.b16 %v219
        %v277 = vunpack.c.h.b16 %v219
        %v278 = vunpack.c.l.b16 %v220
        %v279 = vunpack.c.h.b16 %v220
        %v280 = vunpack.c.l.b16 %v221
        %v281 = vunpack.c.h.b16 %v221
        %v282 = vunpack.c.l.b16 %v222
        %v283 = vunpack.c.h.b16 %v222
        %v284 = vunpack.c.l.b16 %v223
        %v285 = vunpack.c.h.b16 %v223
        %v286 = vunpack.c.l.b16 %v224
        %v287 = vunpack.c.h.b16 %v224
        %v288 = vunpack.c.l.b16 %v225
        %v289 = vunpack.c.h.b16 %v225
        %v290 = vpack.c.b16 %v276, %v274
        %v291 = vpack.c.b16 %v277, %v275
        %v292 = vpack.c.b16 %v280, %v278
        %v293 = vpack.c.b16 %v281, %v279
        %v294 = vpack.c.b16 %v284, %v282
        %v295 = vpack.c.b16 %v285, %v283
        %v296 = vpack.c.b16 %v288, %v286
        %v297 = vpack.c.b16 %v289, %v287
        %vm306 = vcmask 523264
        %v308 = vsel %vm306, %v258, 0
        %v311 = vsel %vm306, %v259, 0
        %v314 = vsel %vm306, %v260, 0
        %v317 = vsel %vm306, %v261, 0
        %v320 = vsel %vm306, %v262, 0
        %v323 = vsel %vm306, %v263, 0
        %v326 = vsel %vm306, %v264, 0
        %v329 = vsel %vm306, %v265, 0
        %331 = vmatpush.bf16.msra.mxu0 0
        %332 = vmatpush.bf16.msra.mxu0 0
        %333 = vmatpush.bf16.msra.mxu0 0
        %334 = vmatpush.bf16.msra.mxu0 0
        %335 = vmatpush.bf16.msra.mxu0 %v296
        %336 = vmatpush.bf16.msra.mxu0 %v294
        %337 = vmatpush.bf16.msra.mxu0 %v292
        %338 = vmatpush.bf16.msra.mxu0 %v290
        %339 = vmatmul.bf16.gmra.mxu0 %v308
        %v340 = vpop.f32.mrf.mxu0
        %v341 = vadd.f32 0.0, %v340
        %v342 = vpop.f32.mrf.mxu0
        %v343 = vadd.f32 0.0, %v342
        %344 = vmatmul.bf16.gmra.mxu0 %v311
        %v345 = vpop.f32.mrf.mxu0
        %v346 = vadd.f32 0.0, %v345
        %v347 = vpop.f32.mrf.mxu0
        %v348 = vadd.f32 0.0, %v347
        %349 = vmatmul.bf16.gmra.mxu0 %v314
        %v350 = vpop.f32.mrf.mxu0
        %v351 = vadd.f32 0.0, %v350
        %v352 = vpop.f32.mrf.mxu0
        %v353 = vadd.f32 0.0, %v352
        %354 = vmatmul.bf16.gmra.mxu0 %v317
        %v355 = vpop.f32.mrf.mxu0
        %v356 = vadd.f32 0.0, %v355
        %v357 = vpop.f32.mrf.mxu0
        %v358 = vadd.f32 0.0, %v357
        %359 = vmatmul.bf16.gmra.mxu0 %v320
        %v360 = vpop.f32.mrf.mxu0
        %v361 = vadd.f32 0.0, %v360
        %v362 = vpop.f32.mrf.mxu0
        %v363 = vadd.f32 0.0, %v362
        %364 = vmatmul.bf16.gmra.mxu0 %v323
        %v365 = vpop.f32.mrf.mxu0
        %v366 = vadd.f32 0.0, %v365
        %v367 = vpop.f32.mrf.mxu0
        %v368 = vadd.f32 0.0, %v367
        %369 = vmatmul.bf16.gmra.mxu0 %v326
        %v370 = vpop.f32.mrf.mxu0
        %v371 = vadd.f32 0.0, %v370
        %v372 = vpop.f32.mrf.mxu0
        %v373 = vadd.f32 0.0, %v372
        %374 = vmatmul.bf16.gmra.mxu0 %v329
        %v375 = vpop.f32.mrf.mxu0
        %v376 = vadd.f32 0.0, %v375
        %v377 = vpop.f32.mrf.mxu0
        %v378 = vadd.f32 0.0, %v377
        %379 = vdwg.mxu0
        %380 = vmatpush.bf16.msra.mxu0 0
        %381 = vmatpush.bf16.msra.mxu0 0
        %382 = vmatpush.bf16.msra.mxu0 0
        %383 = vmatpush.bf16.msra.mxu0 0
        %384 = vmatpush.bf16.msra.mxu0 %v297
        %385 = vmatpush.bf16.msra.mxu0 %v295
        %386 = vmatpush.bf16.msra.mxu0 %v293
        %387 = vmatpush.bf16.msra.mxu0 %v291
        %388 = vmatmul.bf16.gmra.mxu0 %v308
        %v389 = vpop.f32.mrf.mxu0
        %v390 = vadd.f32 0.0, %v389
        %v391 = vpop.f32.mrf.mxu0
        %v392 = vadd.f32 0.0, %v391
        %393 = vmatmul.bf16.gmra.mxu0 %v311
        %v394 = vpop.f32.mrf.mxu0
        %v395 = vadd.f32 0.0, %v394
        %v396 = vpop.f32.mrf.mxu0
        %v397 = vadd.f32 0.0, %v396
        %398 = vmatmul.bf16.gmra.mxu0 %v314
        %v399 = vpop.f32.mrf.mxu0
        %v400 = vadd.f32 0.0, %v399
        %v401 = vpop.f32.mrf.mxu0
        %v402 = vadd.f32 0.0, %v401
        %403 = vmatmul.bf16.gmra.mxu0 %v317
        %v404 = vpop.f32.mrf.mxu0
        %v405 = vadd.f32 0.0, %v404
        %v406 = vpop.f32.mrf.mxu0
        %v407 = vadd.f32 0.0, %v406
        %408 = vmatmul.bf16.gmra.mxu0 %v320
        %v409 = vpop.f32.mrf.mxu0
        %v410 = vadd.f32 0.0, %v409
        %v411 = vpop.f32.mrf.mxu0
        %v412 = vadd.f32 0.0, %v411
        %413 = vmatmul.bf16.gmra.mxu0 %v323
        %v414 = vpop.f32.mrf.mxu0
        %v415 = vadd.f32 0.0, %v414
        %v416 = vpop.f32.mrf.mxu0
        %v417 = vadd.f32 0.0, %v416
        %418 = vmatmul.bf16.gmra.mxu0 %v326
        %v419 = vpop.f32.mrf.mxu0
        %v420 = vadd.f32 0.0, %v419
        %v421 = vpop.f32.mrf.mxu0
        %v422 = vadd.f32 0.0, %v421
        %423 = vmatmul.bf16.gmra.mxu0 %v329
        %v424 = vpop.f32.mrf.mxu0
        %v425 = vadd.f32 0.0, %v424
        %v426 = vpop.f32.mrf.mxu0
        %v427 = vadd.f32 0.0, %v426
        %428 = vdwg.mxu0
        %s429 = sld [smem:[#allocation2]]
        %v430 = vstv %s429
        %v431 = vrcp.pop %v430
        %v432 = vmul.f32 %v430, %v431
        %v433 = vsub.f32 1.0, %v432
        %v434 = vmul.f32 %v431, %v433
        %v435 = vadd.f32 %v431, %v434
        %vm436 = vweird.f32 %v430
        %vm437 = vweird.f32 %v431
        %vm438 = vmor %vm436, %vm437
        %v439 = vsel %vm438, %v431, %v435
        %v440 = vand.u32 2147483647, %v430
        %vm441 = vcmp.eq.f32.partialorder %v440, 8.507059e+37
        %v442 = vand.u32 %v430, 2147483648
        %v443 = vor.u32 1.1754944e-38, %v442
        %v444 = vsel %vm441, %v443, %v439
        %s445 = vtos %v444
        %v446 = vstv %s445
        %v447 = vmul.f32 %v341, %v446
        %v448 = vmul.f32 %v390, %v446
        %v449 = vmul.f32 %v343, %v446
        %v450 = vmul.f32 %v392, %v446
        %v451 = vmul.f32 %v346, %v446
        %v452 = vmul.f32 %v395, %v446
        %v453 = vmul.f32 %v348, %v446
        %v454 = vmul.f32 %v397, %v446
        %v455 = vmul.f32 %v351, %v446
        %v456 = vmul.f32 %v400, %v446
        %v457 = vmul.f32 %v353, %v446
        %v458 = vmul.f32 %v402, %v446
        %v459 = vmul.f32 %v356, %v446
        %v460 = vmul.f32 %v405, %v446
        %v461 = vmul.f32 %v358, %v446
        %v462 = vmul.f32 %v407, %v446
        %v463 = vmul.f32 %v361, %v446
        %v464 = vmul.f32 %v410, %v446
        %v465 = vmul.f32 %v363, %v446
        %v466 = vmul.f32 %v412, %v446
        %v467 = vmul.f32 %v366, %v446
        %v468 = vmul.f32 %v415, %v446
        %v469 = vmul.f32 %v368, %v446
        %v470 = vmul.f32 %v417, %v446
        %v471 = vmul.f32 %v371, %v446
        %v472 = vmul.f32 %v420, %v446
        %v473 = vmul.f32 %v373, %v446
        %v474 = vmul.f32 %v422, %v446
        %v475 = vmul.f32 %v376, %v446
        %v476 = vmul.f32 %v425, %v446
        %v477 = vmul.f32 %v378, %v446
        %v478 = vmul.f32 %v427, %v446
        %v479 = vlaneseq
        %v480 = vand.u32 %v479, 127
        %v481 = vadd.s32 %v480, 128
        %s482 = sld [smem:[#allocation3]]
        %v483 = vstv %s482
        %vm484 = vcmp.lt.s32.totalorder %v480, %v483
        %vm485 = vcmp.lt.s32.totalorder %v481, %v483
        %v486 = vsel %vm484, %v447, -inf
        %v487 = vsel %vm485, %v448, -inf
        %v488 = vsel %vm484, %v449, -inf
        %v489 = vsel %vm485, %v450, -inf
        %v490 = vsel %vm484, %v451, -inf
        %v491 = vsel %vm485, %v452, -inf
        %v492 = vsel %vm484, %v453, -inf
        %v493 = vsel %vm485, %v454, -inf
        %v494 = vsel %vm484, %v455, -inf
        %v495 = vsel %vm485, %v456, -inf
        %v496 = vsel %vm484, %v457, -inf
        %v497 = vsel %vm485, %v458, -inf
        %v498 = vsel %vm484, %v459, -inf
        %v499 = vsel %vm485, %v460, -inf
        %v500 = vsel %vm484, %v461, -inf
        %v501 = vsel %vm485, %v462, -inf
        %v502 = vsel %vm484, %v463, -inf
        %v503 = vsel %vm485, %v464, -inf
        %v504 = vsel %vm484, %v465, -inf
        %v505 = vsel %vm485, %v466, -inf
        %v506 = vsel %vm484, %v467, -inf
        %v507 = vsel %vm485, %v468, -inf
        %v508 = vsel %vm484, %v469, -inf
        %v509 = vsel %vm485, %v470, -inf
        %v510 = vsel %vm484, %v471, -inf
        %v511 = vsel %vm485, %v472, -inf
        %v512 = vsel %vm484, %v473, -inf
        %v513 = vsel %vm485, %v474, -inf
        %v514 = vsel %vm484, %v475, -inf
        %v515 = vsel %vm485, %v476, -inf
        %v516 = vsel %vm484, %v477, -inf
        %v517 = vsel %vm485, %v478, -inf
        %v518 = vmax.f32 %v486, %v487
        %519 = vmax.xlane.f32.xlu0 %v518
        %v520 = vpop.xlane.xlu0 %519
        %v521 = vmax.f32 %v488, %v489
        %522 = vmax.xlane.f32.xlu0 %v521
        %v523 = vpop.xlane.xlu0 %522
        %v524 = vmax.f32 %v490, %v491
        %525 = vmax.xlane.f32.xlu0 %v524
        %v526 = vpop.xlane.xlu0 %525
        %v527 = vmax.f32 %v492, %v493
        %528 = vmax.xlane.f32.xlu0 %v527
        %v529 = vpop.xlane.xlu0 %528
        %v530 = vmax.f32 %v494, %v495
        %531 = vmax.xlane.f32.xlu0 %v530
        %v532 = vpop.xlane.xlu0 %531
        %v533 = vmax.f32 %v496, %v497
        %534 = vmax.xlane.f32.xlu0 %v533
        %v535 = vpop.xlane.xlu0 %534
        %v536 = vmax.f32 %v498, %v499
        %537 = vmax.xlane.f32.xlu0 %v536
        %v538 = vpop.xlane.xlu0 %537
        %v539 = vmax.f32 %v500, %v501
        %540 = vmax.xlane.f32.xlu0 %v539
        %v541 = vpop.xlane.xlu0 %540
        %v542 = vmax.f32 %v502, %v503
        %543 = vmax.xlane.f32.xlu0 %v542
        %v544 = vpop.xlane.xlu0 %543
        %v545 = vmax.f32 %v504, %v505
        %546 = vmax.xlane.f32.xlu0 %v545
        %v547 = vpop.xlane.xlu0 %546
        %v548 = vmax.f32 %v506, %v507
        %549 = vmax.xlane.f32.xlu0 %v548
        %v550 = vpop.xlane.xlu0 %549
        %v551 = vmax.f32 %v508, %v509
        %552 = vmax.xlane.f32.xlu0 %v551
        %v553 = vpop.xlane.xlu0 %552
        %v554 = vmax.f32 %v510, %v511
        %555 = vmax.xlane.f32.xlu0 %v554
        %v556 = vpop.xlane.xlu0 %555
        %v557 = vmax.f32 %v512, %v513
        %558 = vmax.xlane.f32.xlu0 %v557
        %v559 = vpop.xlane.xlu0 %558
        %v560 = vmax.f32 %v514, %v515
        %561 = vmax.xlane.f32.xlu0 %v560
        %v562 = vpop.xlane.xlu0 %561
        %v563 = vmax.f32 %v516, %v517
        %564 = vmax.xlane.f32.xlu0 %v563
        %v565 = vpop.xlane.xlu0 %564
        %v566 = vsub.f32 %v486, %v520
        %v567 = vsub.f32 %v487, %v520
        %v568 = vsub.f32 %v488, %v523
        %v569 = vsub.f32 %v489, %v523
        %v570 = vsub.f32 %v490, %v526
        %v571 = vsub.f32 %v491, %v526
        %v572 = vsub.f32 %v492, %v529
        %v573 = vsub.f32 %v493, %v529
        %v574 = vsub.f32 %v494, %v532
        %v575 = vsub.f32 %v495, %v532
        %v576 = vsub.f32 %v496, %v535
        %v577 = vsub.f32 %v497, %v535
        %v578 = vsub.f32 %v498, %v538
        %v579 = vsub.f32 %v499, %v538
        %v580 = vsub.f32 %v500, %v541
        %v581 = vsub.f32 %v501, %v541
        %v582 = vsub.f32 %v502, %v544
        %v583 = vsub.f32 %v503, %v544
        %v584 = vsub.f32 %v504, %v547
        %v585 = vsub.f32 %v505, %v547
        %v586 = vsub.f32 %v506, %v550
        %v587 = vsub.f32 %v507, %v550
        %v588 = vsub.f32 %v508, %v553
        %v589 = vsub.f32 %v509, %v553
        %v590 = vsub.f32 %v510, %v556
        %v591 = vsub.f32 %v511, %v556
        %v592 = vsub.f32 %v512, %v559
        %v593 = vsub.f32 %v513, %v559
        %v594 = vsub.f32 %v514, %v562
        %v595 = vsub.f32 %v515, %v562
        %v596 = vsub.f32 %v516, %v565
        %v597 = vsub.f32 %v517, %v565
        %v598 = vmul.f32 %v566, 1.442695
        %v599 = vpow.pop %v598
        %v600 = vmul.f32 %v567, 1.442695
        %v601 = vpow.pop %v600
        %v602 = vmul.f32 %v568, 1.442695
        %v603 = vpow.pop %v602
        %v604 = vmul.f32 %v569, 1.442695
        %v605 = vpow.pop %v604
        %v606 = vmul.f32 %v570, 1.442695
        %v607 = vpow.pop %v606
        %v608 = vmul.f32 %v571, 1.442695
        %v609 = vpow.pop %v608
        %v610 = vmul.f32 %v572, 1.442695
        %v611 = vpow.pop %v610
        %v612 = vmul.f32 %v573, 1.442695
        %v613 = vpow.pop %v612
        %v614 = vmul.f32 %v574, 1.442695
        %v615 = vpow.pop %v614
        %v616 = vmul.f32 %v575, 1.442695
        %v617 = vpow.pop %v616
        %v618 = vmul.f32 %v576, 1.442695
        %v619 = vpow.pop %v618
        %v620 = vmul.f32 %v577, 1.442695
        %v621 = vpow.pop %v620
        %v622 = vmul.f32 %v578, 1.442695
        %v623 = vpow.pop %v622
        %v624 = vmul.f32 %v579, 1.442695
        %v625 = vpow.pop %v624
        %v626 = vmul.f32 %v580, 1.442695
        %v627 = vpow.pop %v626
        %v628 = vmul.f32 %v581, 1.442695
        %v629 = vpow.pop %v628
        %v630 = vmul.f32 %v582, 1.442695
        %v631 = vpow.pop %v630
        %v632 = vmul.f32 %v583, 1.442695
        %v633 = vpow.pop %v632
        %v634 = vmul.f32 %v584, 1.442695
        %v635 = vpow.pop %v634
        %v636 = vmul.f32 %v585, 1.442695
        %v637 = vpow.pop %v636
        %v638 = vmul.f32 %v586, 1.442695
        %v639 = vpow.pop %v638
        %v640 = vmul.f32 %v587, 1.442695
        %v641 = vpow.pop %v640
        %v642 = vmul.f32 %v588, 1.442695
        %v643 = vpow.pop %v642
        %v644 = vmul.f32 %v589, 1.442695
        %v645 = vpow.pop %v644
        %v646 = vmul.f32 %v590, 1.442695
        %v647 = vpow.pop %v646
        %v648 = vmul.f32 %v591, 1.442695
        %v649 = vpow.pop %v648
        %v650 = vmul.f32 %v592, 1.442695
        %v651 = vpow.pop %v650
        %v652 = vmul.f32 %v593, 1.442695
        %v653 = vpow.pop %v652
        %v654 = vmul.f32 %v594, 1.442695
        %v655 = vpow.pop %v654
        %v656 = vmul.f32 %v595, 1.442695
        %v657 = vpow.pop %v656
        %v658 = vmul.f32 %v596, 1.442695
        %v659 = vpow.pop %v658
        %v660 = vmul.f32 %v597, 1.442695
        %v661 = vpow.pop %v660
        %v662 = vadd.f32 %v599, %v601
        %663 = vadd.xlane.f32.xlu0 %v662
        %v664 = vpop.xlane.xlu0 %663
        %v665 = vadd.f32 %v603, %v605
        %666 = vadd.xlane.f32.xlu0 %v665
        %v667 = vpop.xlane.xlu0 %666
        %v668 = vadd.f32 %v607, %v609
        %669 = vadd.xlane.f32.xlu0 %v668
        %v670 = vpop.xlane.xlu0 %669
        %v671 = vadd.f32 %v611, %v613
        %672 = vadd.xlane.f32.xlu0 %v671
        %v673 = vpop.xlane.xlu0 %672
        %v674 = vadd.f32 %v615, %v617
        %675 = vadd.xlane.f32.xlu0 %v674
        %v676 = vpop.xlane.xlu0 %675
        %v677 = vadd.f32 %v619, %v621
        %678 = vadd.xlane.f32.xlu0 %v677
        %v679 = vpop.xlane.xlu0 %678
        %v680 = vadd.f32 %v623, %v625
        %681 = vadd.xlane.f32.xlu0 %v680
        %v682 = vpop.xlane.xlu0 %681
        %v683 = vadd.f32 %v627, %v629
        %684 = vadd.xlane.f32.xlu0 %v683
        %v685 = vpop.xlane.xlu0 %684
        %v686 = vadd.f32 %v631, %v633
        %687 = vadd.xlane.f32.xlu0 %v686
        %v688 = vpop.xlane.xlu0 %687
        %v689 = vadd.f32 %v635, %v637
        %690 = vadd.xlane.f32.xlu0 %v689
        %v691 = vpop.xlane.xlu0 %690
        %v692 = vadd.f32 %v639, %v641
        %693 = vadd.xlane.f32.xlu0 %v692
        %v694 = vpop.xlane.xlu0 %693
        %v695 = vadd.f32 %v643, %v645
        %696 = vadd.xlane.f32.xlu0 %v695
        %v697 = vpop.xlane.xlu0 %696
        %v698 = vadd.f32 %v647, %v649
        %699 = vadd.xlane.f32.xlu0 %v698
        %v700 = vpop.xlane.xlu0 %699
        %v701 = vadd.f32 %v651, %v653
        %702 = vadd.xlane.f32.xlu0 %v701
        %v703 = vpop.xlane.xlu0 %702
        %v704 = vadd.f32 %v655, %v657
        %705 = vadd.xlane.f32.xlu0 %v704
        %v706 = vpop.xlane.xlu0 %705
        %v707 = vadd.f32 %v659, %v661
        %708 = vadd.xlane.f32.xlu0 %v707
        %v709 = vpop.xlane.xlu0 %708
        %v710 = vadd.f32 %v664, 1e-10
        %v711 = vadd.f32 %v667, 1e-10
        %v712 = vadd.f32 %v670, 1e-10
        %v713 = vadd.f32 %v673, 1e-10
        %v714 = vadd.f32 %v676, 1e-10
        %v715 = vadd.f32 %v679, 1e-10
        %v716 = vadd.f32 %v682, 1e-10
        %v717 = vadd.f32 %v685, 1e-10
        %v718 = vadd.f32 %v688, 1e-10
        %v719 = vadd.f32 %v691, 1e-10
        %v720 = vadd.f32 %v694, 1e-10
        %v721 = vadd.f32 %v697, 1e-10
        %v722 = vadd.f32 %v700, 1e-10
        %v723 = vadd.f32 %v703, 1e-10
        %v724 = vadd.f32 %v706, 1e-10
        %v725 = vadd.f32 %v709, 1e-10
        %v726 = vrcp.pop %v710
        %v727 = vmul.f32 %v710, %v726
        %v728 = vsub.f32 1.0, %v727
        %v729 = vmul.f32 %v726, %v728
        %v730 = vadd.f32 %v726, %v729
        %vm731 = vweird.f32 %v710
        %vm732 = vweird.f32 %v726
        %vm733 = vmor %vm731, %vm732
        %v734 = vsel %vm733, %v726, %v730
        %v735 = vand.u32 2147483647, %v710
        %vm736 = vcmp.eq.f32.partialorder %v735, 8.507059e+37
        %v737 = vand.u32 %v710, 2147483648
        %v738 = vor.u32 1.1754944e-38, %v737
        %v739 = vsel %vm736, %v738, %v734
        %v740 = vrcp.pop %v711
        %v741 = vmul.f32 %v711, %v740
        %v742 = vsub.f32 1.0, %v741
        %v743 = vmul.f32 %v740, %v742
        %v744 = vadd.f32 %v740, %v743
        %vm745 = vweird.f32 %v711
        %vm746 = vweird.f32 %v740
        %vm747 = vmor %vm745, %vm746
        %v748 = vsel %vm747, %v740, %v744
        %v749 = vand.u32 2147483647, %v711
        %vm750 = vcmp.eq.f32.partialorder %v749, 8.507059e+37
        %v751 = vand.u32 %v711, 2147483648
        %v752 = vor.u32 1.1754944e-38, %v751
        %v753 = vsel %vm750, %v752, %v748
        %v754 = vrcp.pop %v712
        %v755 = vmul.f32 %v712, %v754
        %v756 = vsub.f32 1.0, %v755
        %v757 = vmul.f32 %v754, %v756
        %v758 = vadd.f32 %v754, %v757
        %vm759 = vweird.f32 %v712
        %vm760 = vweird.f32 %v754
        %vm761 = vmor %vm759, %vm760
        %v762 = vsel %vm761, %v754, %v758
        %v763 = vand.u32 2147483647, %v712
        %vm764 = vcmp.eq.f32.partialorder %v763, 8.507059e+37
        %v765 = vand.u32 %v712, 2147483648
        %v766 = vor.u32 1.1754944e-38, %v765
        %v767 = vsel %vm764, %v766, %v762
        %v768 = vrcp.pop %v713
        %v769 = vmul.f32 %v713, %v768
        %v770 = vsub.f32 1.0, %v769
        %v771 = vmul.f32 %v768, %v770
        %v772 = vadd.f32 %v768, %v771
        %vm773 = vweird.f32 %v713
        %vm774 = vweird.f32 %v768
        %vm775 = vmor %vm773, %vm774
        %v776 = vsel %vm775, %v768, %v772
        %v777 = vand.u32 2147483647, %v713
        %vm778 = vcmp.eq.f32.partialorder %v777, 8.507059e+37
        %v779 = vand.u32 %v713, 2147483648
        %v780 = vor.u32 1.1754944e-38, %v779
        %v781 = vsel %vm778, %v780, %v776
        %v782 = vrcp.pop %v714
        %v783 = vmul.f32 %v714, %v782
        %v784 = vsub.f32 1.0, %v783
        %v785 = vmul.f32 %v782, %v784
        %v786 = vadd.f32 %v782, %v785
        %vm787 = vweird.f32 %v714
        %vm788 = vweird.f32 %v782
        %vm789 = vmor %vm787, %vm788
        %v790 = vsel %vm789, %v782, %v786
        %v791 = vand.u32 2147483647, %v714
        %vm792 = vcmp.eq.f32.partialorder %v791, 8.507059e+37
        %v793 = vand.u32 %v714, 2147483648
        %v794 = vor.u32 1.1754944e-38, %v793
        %v795 = vsel %vm792, %v794, %v790
        %v796 = vrcp.pop %v715
        %v797 = vmul.f32 %v715, %v796
        %v798 = vsub.f32 1.0, %v797
        %v799 = vmul.f32 %v796, %v798
        %v800 = vadd.f32 %v796, %v799
        %vm801 = vweird.f32 %v715
        %vm802 = vweird.f32 %v796
        %vm803 = vmor %vm801, %vm802
        %v804 = vsel %vm803, %v796, %v800
        %v805 = vand.u32 2147483647, %v715
        %vm806 = vcmp.eq.f32.partialorder %v805, 8.507059e+37
        %v807 = vand.u32 %v715, 2147483648
        %v808 = vor.u32 1.1754944e-38, %v807
        %v809 = vsel %vm806, %v808, %v804
        %v810 = vrcp.pop %v716
        %v811 = vmul.f32 %v716, %v810
        %v812 = vsub.f32 1.0, %v811
        %v813 = vmul.f32 %v810, %v812
        %v814 = vadd.f32 %v810, %v813
        %vm815 = vweird.f32 %v716
        %vm816 = vweird.f32 %v810
        %vm817 = vmor %vm815, %vm816
        %v818 = vsel %vm817, %v810, %v814
        %v819 = vand.u32 2147483647, %v716
        %vm820 = vcmp.eq.f32.partialorder %v819, 8.507059e+37
        %v821 = vand.u32 %v716, 2147483648
        %v822 = vor.u32 1.1754944e-38, %v821
        %v823 = vsel %vm820, %v822, %v818
        %v824 = vrcp.pop %v717
        %v825 = vmul.f32 %v717, %v824
        %v826 = vsub.f32 1.0, %v825
        %v827 = vmul.f32 %v824, %v826
        %v828 = vadd.f32 %v824, %v827
        %vm829 = vweird.f32 %v717
        %vm830 = vweird.f32 %v824
        %vm831 = vmor %vm829, %vm830
        %v832 = vsel %vm831, %v824, %v828
        %v833 = vand.u32 2147483647, %v717
        %vm834 = vcmp.eq.f32.partialorder %v833, 8.507059e+37
        %v835 = vand.u32 %v717, 2147483648
        %v836 = vor.u32 1.1754944e-38, %v835
        %v837 = vsel %vm834, %v836, %v832
        %v838 = vrcp.pop %v718
        %v839 = vmul.f32 %v718, %v838
        %v840 = vsub.f32 1.0, %v839
        %v841 = vmul.f32 %v838, %v840
        %v842 = vadd.f32 %v838, %v841
        %vm843 = vweird.f32 %v718
        %vm844 = vweird.f32 %v838
        %vm845 = vmor %vm843, %vm844
        %v846 = vsel %vm845, %v838, %v842
        %v847 = vand.u32 2147483647, %v718
        %vm848 = vcmp.eq.f32.partialorder %v847, 8.507059e+37
        %v849 = vand.u32 %v718, 2147483648
        %v850 = vor.u32 1.1754944e-38, %v849
        %v851 = vsel %vm848, %v850, %v846
        %v852 = vrcp.pop %v719
        %v853 = vmul.f32 %v719, %v852
        %v854 = vsub.f32 1.0, %v853
        %v855 = vmul.f32 %v852, %v854
        %v856 = vadd.f32 %v852, %v855
        %vm857 = vweird.f32 %v719
        %vm858 = vweird.f32 %v852
        %vm859 = vmor %vm857, %vm858
        %v860 = vsel %vm859, %v852, %v856
        %v861 = vand.u32 2147483647, %v719
        %vm862 = vcmp.eq.f32.partialorder %v861, 8.507059e+37
        %v863 = vand.u32 %v719, 2147483648
        %v864 = vor.u32 1.1754944e-38, %v863
        %v865 = vsel %vm862, %v864, %v860
        %v866 = vrcp.pop %v720
        %v867 = vmul.f32 %v720, %v866
        %v868 = vsub.f32 1.0, %v867
        %v869 = vmul.f32 %v866, %v868
        %v870 = vadd.f32 %v866, %v869
        %vm871 = vweird.f32 %v720
        %vm872 = vweird.f32 %v866
        %vm873 = vmor %vm871, %vm872
        %v874 = vsel %vm873, %v866, %v870
        %v875 = vand.u32 2147483647, %v720
        %vm876 = vcmp.eq.f32.partialorder %v875, 8.507059e+37
        %v877 = vand.u32 %v720, 2147483648
        %v878 = vor.u32 1.1754944e-38, %v877
        %v879 = vsel %vm876, %v878, %v874
        %v880 = vrcp.pop %v721
        %v881 = vmul.f32 %v721, %v880
        %v882 = vsub.f32 1.0, %v881
        %v883 = vmul.f32 %v880, %v882
        %v884 = vadd.f32 %v880, %v883
        %vm885 = vweird.f32 %v721
        %vm886 = vweird.f32 %v880
        %vm887 = vmor %vm885, %vm886
        %v888 = vsel %vm887, %v880, %v884
        %v889 = vand.u32 2147483647, %v721
        %vm890 = vcmp.eq.f32.partialorder %v889, 8.507059e+37
        %v891 = vand.u32 %v721, 2147483648
        %v892 = vor.u32 1.1754944e-38, %v891
        %v893 = vsel %vm890, %v892, %v888
        %v894 = vrcp.pop %v722
        %v895 = vmul.f32 %v722, %v894
        %v896 = vsub.f32 1.0, %v895
        %v897 = vmul.f32 %v894, %v896
        %v898 = vadd.f32 %v894, %v897
        %vm899 = vweird.f32 %v722
        %vm900 = vweird.f32 %v894
        %vm901 = vmor %vm899, %vm900
        %v902 = vsel %vm901, %v894, %v898
        %v903 = vand.u32 2147483647, %v722
        %vm904 = vcmp.eq.f32.partialorder %v903, 8.507059e+37
        %v905 = vand.u32 %v722, 2147483648
        %v906 = vor.u32 1.1754944e-38, %v905
        %v907 = vsel %vm904, %v906, %v902
        %v908 = vrcp.pop %v723
        %v909 = vmul.f32 %v723, %v908
        %v910 = vsub.f32 1.0, %v909
        %v911 = vmul.f32 %v908, %v910
        %v912 = vadd.f32 %v908, %v911
        %vm913 = vweird.f32 %v723
        %vm914 = vweird.f32 %v908
        %vm915 = vmor %vm913, %vm914
        %v916 = vsel %vm915, %v908, %v912
        %v917 = vand.u32 2147483647, %v723
        %vm918 = vcmp.eq.f32.partialorder %v917, 8.507059e+37
        %v919 = vand.u32 %v723, 2147483648
        %v920 = vor.u32 1.1754944e-38, %v919
        %v921 = vsel %vm918, %v920, %v916
        %v922 = vrcp.pop %v724
        %v923 = vmul.f32 %v724, %v922
        %v924 = vsub.f32 1.0, %v923
        %v925 = vmul.f32 %v922, %v924
        %v926 = vadd.f32 %v922, %v925
        %vm927 = vweird.f32 %v724
        %vm928 = vweird.f32 %v922
        %vm929 = vmor %vm927, %vm928
        %v930 = vsel %vm929, %v922, %v926
        %v931 = vand.u32 2147483647, %v724
        %vm932 = vcmp.eq.f32.partialorder %v931, 8.507059e+37
        %v933 = vand.u32 %v724, 2147483648
        %v934 = vor.u32 1.1754944e-38, %v933
        %v935 = vsel %vm932, %v934, %v930
        %v936 = vrcp.pop %v725
        %v937 = vmul.f32 %v725, %v936
        %v938 = vsub.f32 1.0, %v937
        %v939 = vmul.f32 %v936, %v938
        %v940 = vadd.f32 %v936, %v939
        %vm941 = vweird.f32 %v725
        %vm942 = vweird.f32 %v936
        %vm943 = vmor %vm941, %vm942
        %v944 = vsel %vm943, %v936, %v940
        %v945 = vand.u32 2147483647, %v725
        %vm946 = vcmp.eq.f32.partialorder %v945, 8.507059e+37
        %v947 = vand.u32 %v725, 2147483648
        %v948 = vor.u32 1.1754944e-38, %v947
        %v949 = vsel %vm946, %v948, %v944
        %v950 = vmul.f32 %v599, %v739
        %v951 = vmul.f32 %v601, %v739
        %v952 = vmul.f32 %v603, %v753
        %v953 = vmul.f32 %v605, %v753
        %v954 = vmul.f32 %v607, %v767
        %v955 = vmul.f32 %v609, %v767
        %v956 = vmul.f32 %v611, %v781
        %v957 = vmul.f32 %v613, %v781
        %v958 = vmul.f32 %v615, %v795
        %v959 = vmul.f32 %v617, %v795
        %v960 = vmul.f32 %v619, %v809
        %v961 = vmul.f32 %v621, %v809
        %v962 = vmul.f32 %v623, %v823
        %v963 = vmul.f32 %v625, %v823
        %v964 = vmul.f32 %v627, %v837
        %v965 = vmul.f32 %v629, %v837
        %v966 = vmul.f32 %v631, %v851
        %v967 = vmul.f32 %v633, %v851
        %v968 = vmul.f32 %v635, %v865
        %v969 = vmul.f32 %v637, %v865
        %v970 = vmul.f32 %v639, %v879
        %v971 = vmul.f32 %v641, %v879
        %v972 = vmul.f32 %v643, %v893
        %v973 = vmul.f32 %v645, %v893
        %v974 = vmul.f32 %v647, %v907
        %v975 = vmul.f32 %v649, %v907
        %v976 = vmul.f32 %v651, %v921
        %v977 = vmul.f32 %v653, %v921
        %v978 = vmul.f32 %v655, %v935
        %v979 = vmul.f32 %v657, %v935
        %v980 = vmul.f32 %v659, %v949
        %v981 = vmul.f32 %v661, %v949
        %982 = vst [vmem:[%s193] sm:$0xff] %v950
        %983 = vst [vmem:[%s193 + $0x8] sm:$0xff] %v951
        %984 = vst [vmem:[%s193 + $0x10] sm:$0xff] %v952
        %985 = vst [vmem:[%s193 + $0x18] sm:$0xff] %v953
        %986 = vst [vmem:[%s193 + $0x20] sm:$0xff] %v954
        %987 = vst [vmem:[%s193 + $0x28] sm:$0xff] %v955
        %988 = vst [vmem:[%s193 + $0x30] sm:$0xff] %v956
        %989 = vst [vmem:[%s193 + $0x38] sm:$0xff] %v957
        %990 = vst [vmem:[%s193 + $0x40] sm:$0xff] %v958
        %991 = vst [vmem:[%s193 + $0x48] sm:$0xff] %v959
        %992 = vst [vmem:[%s193 + $0x50] sm:$0xff] %v960
        %993 = vst [vmem:[%s193 + $0x58] sm:$0xff] %v961
        %994 = vst [vmem:[%s193 + $0x60] sm:$0xff] %v962
        %995 = vst [vmem:[%s193 + $0x68] sm:$0xff] %v963
        %996 = vst [vmem:[%s193 + $0x70] sm:$0xff] %v964
        %997 = vst [vmem:[%s193 + $0x78] sm:$0xff] %v965
        %998 = vst [vmem:[%s193 + $0x80] sm:$0xff] %v966
        %999 = vst [vmem:[%s193 + $0x88] sm:$0xff] %v967
        %1000 = vst [vmem:[%s193 + $0x90] sm:$0xff] %v968
        %1001 = vst [vmem:[%s193 + $0x98] sm:$0xff] %v969
        %1002 = vst [vmem:[%s193 + $0xa0] sm:$0xff] %v970
        %1003 = vst [vmem:[%s193 + $0xa8] sm:$0xff] %v971
        %1004 = vst [vmem:[%s193 + $0xb0] sm:$0xff] %v972
        %1005 = vst [vmem:[%s193 + $0xb8] sm:$0xff] %v973
        %1006 = vst [vmem:[%s193 + $0xc0] sm:$0xff] %v974
        %1007 = vst [vmem:[%s193 + $0xc8] sm:$0xff] %v975
        %1008 = vst [vmem:[%s193 + $0xd0] sm:$0xff] %v976
        %1009 = vst [vmem:[%s193 + $0xd8] sm:$0xff] %v977
        %1010 = vst [vmem:[%s193 + $0xe0] sm:$0xff] %v978
        %1011 = vst [vmem:[%s193 + $0xe8] sm:$0xff] %v979
        %1012 = vst [vmem:[%s193 + $0xf0] sm:$0xff] %v980
        %1013 = vst [vmem:[%s193 + $0xf8] sm:$0xff] %v981
        %s1014 = sand.u32 %s117, 1
        %s1015 = scalar_lea.sflag [#allocation5], %s1014
        %s1016 = sand.u32 %s117, 1
        %s1017 = smul.addr %s1016, 256
        %s1018 = scalar_lea.vmem [#allocation4], %s1017
        // Predicated region
        $region37: #{tpu_custom_call.1} parent=35 // pred_check
          %p1019 = pneg %p127
        $region38: #{tpu_custom_call.1} parent=35 // pred_check_branch
          %1021 = sbr.rel (%p1019) target = $region40
        $region39: #{tpu_custom_call.1} parent=35 // pred_region
          %s1022 = smul.u32 16, %s20
          %1024 = vsyncadd %s1015, 0
          %s1025 = smul.addr %s1022, 2
          %s1026 = smul.addr %s1025, 8
          %s1027 = scalar_lea.hbm %s4, %s1026
          %s1028 = sshll.u32 %s1018, 4
          %s1029 = int_to_ptr.vmem [resolvable:$true] %s1028
          %s1030 = sshll.u32 %s1027, 4
          %s1031 = int_to_ptr.hbm [resolvable:$true] %s1030
          %1036 = dma.vmem_to_hbm [thread:$0]  %s1029, 4096, %s1031, %s1015, 256, 256, 16
        $region40: #{tpu_custom_call.1} parent=35 // pred_fallthru
          _
      $region36: #{tpu_custom_call.1} parent=5 // pred_fallthru
        _
      %p1037 = scmp.le.s32.totalorder 2, %s15
      // Predicated region
      $region41: #{tpu_custom_call.1} parent=5 // pred_check
        %p1038 = pneg %p1037
      $region42: #{tpu_custom_call.1} parent=5 // pred_check_branch
        %1040 = sbr.rel (%p1038) target = $region44
      $region43: #{tpu_custom_call.1} parent=5 // pred_region
        %s1041 = ssub.s32 %s15, 2
        // Predicated region
        $region45: #{tpu_custom_call.1} parent=43 // pred_check
          %p1042 = pneg %p133
        $region46: #{tpu_custom_call.1} parent=43 // pred_check_branch
          %1044 = sbr.rel (%p1042) target = $region48
        $region47: #{tpu_custom_call.1} parent=43 // pred_region
          %s1045 = sand.u32 %s118, 1
          %s1046 = scalar_lea.sflag [#allocation5], %s1045
          %s1047 = sand.u32 %s118, 1
          %s1048 = smul.addr %s1047, 256
          %s1049 = scalar_lea.vmem [#allocation4], %s1048
          %1051 = dma.done %s1046, 4096
        $region48: #{tpu_custom_call.1} parent=43 // pred_fallthru
          _
      $region44: #{tpu_custom_call.1} parent=5 // pred_fallthru
        _
    $region6: #{tpu_custom_call.1} parent=1 // loop_footer
      %s19 = sadd.s32 1, %s15
    $region7: #{tpu_custom_call.1} parent=1 // loop_footer_branch
      %14 = sbr.rel target = $region3
    $region8: #{tpu_custom_call.1} parent=1 // loop_exit
      _
    %1052 = vsyncpa [#allocation5], 1
    %s1053 = scalar_lea.sflag [#allocation5], 1
    %1054 = vsyncpa %s1053, 1

</llo_original>
